<compile_context>
chip_gen: v7x
topology: tpu7x:2x2x1
jax: 0.10.0
libtpu: 0.0.40
codegen_flags: <defaults>
</compile_context>

<pallas_src>
import functools

import jax
import jax.numpy as jnp
import numpy as np
from jax import lax
from jax.experimental import pallas as pl
from jax.experimental.pallas import tpu as pltpu


@functools.lru_cache(maxsize=None)
def _build_index(n: int) -> np.ndarray:
    """Replicates the python index-list construction (reference check only)."""
    index = [-6, -5, -4, -3, -2, -1]
    for i in range(n - 6):
        index += [i, -5, -4, -3, -2, -1]
        index += [-6, i, -4, -3, -2, -1]
        index += [-6, -5, i, -3, -2, -1]
        index += [-6, -5, -4, i, -2, -1]
        index += [-6, -5, -4, -3, i, -1]
        index += [-6, -5, -4, -3, -2, i]
    idx = np.asarray(index, dtype=np.int32)
    return np.where(idx < 0, idx + n, idx).astype(np.int32)


def _make_resident_kernel(n: int, sd: int, unroll_threshold: int = 32):
    """Whole-(L, sd) output slab resident in VMEM; one grid step per batch."""
    n_var = n - 6

    def kernel(x_ref, o_ref):
        # x_ref: (n, sd) per-batch input slab; o_ref: (L, sd) per-batch output slab.
        tail = x_ref[n - 6:, :]                       # (6, sd) last-6 rows
        o_ref[0:6, :] = tail                          # head: output rows 0..5

        if n_var == 0:
            return

        # Hoisted out of all loops: 6x-tiled tail background and the mask of
        # "replaced" rows within a 36-row group (rows 0, 7, 14, 21, 28, 35).
        tail36 = jnp.tile(tail, (6, 1))                               # (36, sd)
        row36 = lax.broadcasted_iota(jnp.int32, (36, 1), 0)
        mask36 = (row36 % 7) == 0                                     # (36, 1)

        def group_block(var):                         # var: (1, sd) == x[g]
            return jnp.where(mask36, var, tail36)     # (36, sd)

        if n_var <= unroll_threshold:
            # Small trip count: fully static unroll (all offsets static).
            for g in range(n_var):
                o_ref[6 + 36 * g: 6 + 36 * (g + 1), :] = group_block(x_ref[g:g + 1, :])
        else:
            # 8 groups per iteration from one aligned 8-row load of x.
            n_blk = n_var // 8

            def body(blk, carry):
                g0 = pl.multiple_of(blk * 8, 8)
                x8 = x_ref[pl.ds(g0, 8), :]           # (8, sd) aligned load
                base = pl.multiple_of(6 + (36 * 8) * blk, 2)
                for j in range(8):                    # static unroll -> ILP
                    o_ref[pl.ds(base + 36 * j, 36), :] = group_block(x8[j:j + 1, :])
                return carry

            lax.fori_loop(0, n_blk, body, 0)
            # Static remainder.
            for g in range(8 * n_blk, n_var):
                o_ref[6 + 36 * g: 6 + 36 * (g + 1), :] = group_block(x_ref[g:g + 1, :])

    return kernel


def _pick_chunk_groups(n_var: int, max_g: int = 8) -> int:
    """Largest divisor of n_var that is <= max_g (so chunks tile L exactly)."""
    for g in range(min(max_g, n_var), 0, -1):
        if n_var % g == 0:
            return g
    return 1


def _make_chunked_kernel(n: int, sd: int, G: int):
    """Large-n path: output stays in HBM; each chunk of G groups is built in a
    (36*G, sd) VMEM scratch and written with one contiguous DMA."""
    R = 36 * G

    def kernel(x_ref, o_hbm, obuf):
        # x_ref: (n, sd) VMEM block (index_map constant over the chunk axis,
        #        so x[b] is DMA'd once per batch).
        # o_hbm: (b, L, sd) output ref left in HBM (pl.ANY); written via DMA.
        # obuf : (R, sd) VMEM scratch for one chunk.
        bi = pl.program_id(0)
        ci = pl.program_id(1)

        tail = x_ref[n - 6:, :]
        tail36 = jnp.tile(tail, (6, 1))
        row36 = lax.broadcasted_iota(jnp.int32, (36, 1), 0)
        mask36 = (row36 % 7) == 0

        # Head rows 0..5, once per batch (staged through obuf -> aligned src).
        @pl.when(ci == 0)
        def _():
            obuf[0:6, :] = tail
            pltpu.sync_copy(obuf.at[pl.ds(0, 6), :], o_hbm.at[bi, pl.ds(0, 6), :])

        # Build G groups of this chunk in VMEM (fused 36-row selects).
        g0 = ci * G
        for j in range(G):                            # static unroll
            var = x_ref[pl.ds(g0 + j, 1), :]
            obuf[36 * j: 36 * (j + 1), :] = jnp.where(mask36, var, tail36)

        # One contiguous DMA of the chunk to its place in HBM.
        pltpu.sync_copy(obuf, o_hbm.at[bi, pl.ds(6 + R * ci, R), :])

    return kernel


def get_choise(x: jax.Array, *, vmem_budget_bytes: int = 48 * 1024 * 1024) -> jax.Array:
    b, n, s, d = x.shape
    if n < 6:
        raise ValueError(f"get_choise requires n >= 6, got n={n}")
    L = 6 + 36 * (n - 6)
    sd = s * d
    itemsize = jnp.dtype(x.dtype).itemsize

    x2 = x.reshape(b, n, sd)                          # lane-dense trailing dim

    cost = pl.CostEstimate(flops=0, transcendentals=0,
                           bytes_accessed=b * (n + L) * sd * itemsize)

    # Double-buffered per-batch input + output slabs for the resident design.
    resident_need = 2 * (n + L) * sd * itemsize

    if resident_need <= vmem_budget_bytes:
        # Resident path: one read of x[b] and one write of out[b] per batch.
        vmem_limit = int(min(max(resident_need + (4 << 20), 16 << 20), 100 << 20))
        gathered = pl.pallas_call(
            _make_resident_kernel(n, sd),
            out_shape=jax.ShapeDtypeStruct((b, L, sd), x.dtype),
            grid=(b,),
            in_specs=[pl.BlockSpec((None, n, sd), lambda bi: (bi, 0, 0))],
            out_specs=pl.BlockSpec((None, L, sd), lambda bi: (bi, 0, 0)),
            compiler_params=pltpu.CompilerParams(
                dimension_semantics=("parallel",),    # pure copy, no reduction
                vmem_limit_bytes=vmem_limit,
            ),
            cost_estimate=cost,
        )(x2)
    else:
        # Chunked path for large n: bound VMEM by tiling the L axis in chunks
        # of G groups; needed once 2*(n+L)*sd*itemsize exceeds scoped/physical
        # VMEM (v7x: 64 MiB physical, 32 MiB default scoped).
        n_var = n - 6
        G = _pick_chunk_groups(n_var)
        n_chunks = n_var // G
        vmem_limit = int(min(2 * n * sd * itemsize + 36 * G * sd * itemsize + (8 << 20),
                             100 << 20))
        gathered = pl.pallas_call(
            _make_chunked_kernel(n, sd, G),
            out_shape=jax.ShapeDtypeStruct((b, L, sd), x.dtype),
            grid=(b, n_chunks),
            in_specs=[pl.BlockSpec((None, n, sd), lambda bi, ci: (bi, 0, 0))],
            out_specs=pl.BlockSpec(memory_space=pl.ANY),
            scratch_shapes=[pltpu.VMEM((36 * G, sd), x.dtype)],
            compiler_params=pltpu.CompilerParams(
                dimension_semantics=("parallel", "parallel"),  # 2-TC sharding on v7x
                vmem_limit_bytes=vmem_limit,
            ),
            cost_estimate=cost,
        )(x2)

    # Same reshape order as torch: split L row-major into (6, L // 6).
    return gathered.reshape(b, 6, L // 6, s, d)


if __name__ == "__main__":
    key = jax.random.PRNGKey(0)

    def _check(b, n, s, d):
        x = jax.random.normal(jax.random.fold_in(key, n), (b, n, s, d), dtype=jnp.float32)
        out = jax.block_until_ready(jax.jit(get_choise)(x))
        idx_np = _build_index(n)
        ref = x[:, idx_np].reshape(b, 6, -1, s, d)
        assert out.shape == ref.shape, (out.shape, ref.shape)
        np.testing.assert_array_equal(np.asarray(out), np.asarray(ref))

    _check(2, 8, 8, 32)    # small n: static-unroll path, sd = 256
    _check(2, 26, 8, 16)   # larger n: dynamic 8-groups-per-iteration path, sd = 128
    print("KERNEL_OK")
</pallas_src>

<mosaic_0001>
module attributes {stable_mosaic.version = 11 : i64} {
  func.func @kernel(%arg0: i32, %arg1: memref<1x8x256xf32, #tpu.memory_space<vmem>>, %arg2: memref<1x78x256xf32, #tpu.memory_space<vmem>>) attributes {dimension_semantics = [#tpu.dimension_semantics<parallel>], iteration_bounds = array<i64: 2>, scalar_prefetch = 0 : i64, scratch_operands = 0 : i64, tpu.core_type = #tpu.core_type<tc>, window_params = [{transform_indices = @transform_0, window_bounds = array<i64: 1, 8, 256>}, {transform_indices = @transform_1, window_bounds = array<i64: 1, 78, 256>}]} {
    %c0 = arith.constant 0 : index
    %c2 = arith.constant 2 : index
    %c0_0 = arith.constant 0 : index
    %0 = vector.load %arg1[%c0, %c2, %c0_0] : memref<1x8x256xf32, #tpu.memory_space<vmem>>, vector<1x6x256xf32>
    %1 = vector.shape_cast %0 : vector<1x6x256xf32> to vector<6x256xf32>
    %c0_1 = arith.constant 0 : index
    %c0_2 = arith.constant 0 : index
    %c0_3 = arith.constant 0 : index
    %2 = vector.load %arg2[%c0_1, %c0_2, %c0_3] : memref<1x78x256xf32, #tpu.memory_space<vmem>>, vector<1x6x256xf32>
    %3 = vector.shape_cast %2 : vector<1x6x256xf32> to vector<6x256xf32>
    %4 = vector.shape_cast %1 : vector<6x256xf32> to vector<1x6x256xf32>
    tpu.vector_store %arg2[%c0_1, %c0_2, %c0_3], %4 {strides = array<i32>} : memref<1x78x256xf32, #tpu.memory_space<vmem>>, vector<1x6x256xf32>,
    %5 = tpu.concatenate %1, %1, %1, %1, %1, %1 in 0 : vector<6x256xf32>, vector<6x256xf32>, vector<6x256xf32>, vector<6x256xf32>, vector<6x256xf32>, vector<6x256xf32> -> vector<36x256xf32>
    %6 = tpu.iota {dimensions = array<i32: 0>} : vector<36x1xi32>
    %c7_i32 = arith.constant 7 : i32
    %c0_i32 = arith.constant 0 : i32
    %7 = arith.cmpi eq, %c7_i32, %c0_i32 : i32
    %c1_i32 = arith.constant 1 : i32
    %8 = arith.select %7, %c1_i32, %c7_i32 : i32
    %9 = vector.broadcast %8 : i32 to vector<36x1xi32>
    %10 = arith.remsi %6, %9 : vector<36x1xi32>
    %c0_i32_4 = arith.constant 0 : i32
    %11 = vector.broadcast %c0_i32_4 : i32 to vector<36x1xi32>
    %12 = arith.cmpi ne, %10, %11 : vector<36x1xi32>
    %c0_i32_5 = arith.constant 0 : i32
    %13 = vector.broadcast %c0_i32_5 : i32 to vector<36x1xi32>
    %14 = arith.cmpi slt, %10, %13 : vector<36x1xi32>
    %c0_i32_6 = arith.constant 0 : i32
    %15 = arith.cmpi slt, %8, %c0_i32_6 : i32
    %16 = vector.broadcast %15 : i1 to vector<36x1xi1>
    %17 = vector.broadcast %16 : vector<36x1xi1> to vector<36x1xi1>
    %18 = arith.xori %14, %17 : vector<36x1xi1>
    %19 = arith.andi %18, %12 : vector<36x1xi1>
    %20 = vector.broadcast %8 : i32 to vector<36x1xi32>
    %21 = arith.addi %10, %20 : vector<36x1xi32>
    %22 = arith.select %19, %21, %10 : vector<36x1xi1>, vector<36x1xi32>
    %c0_i32_7 = arith.constant 0 : i32
    %23 = vector.broadcast %c0_i32_7 : i32 to vector<36x1xi32>
    %24 = arith.cmpi eq, %22, %23 : vector<36x1xi32>
    %c0_8 = arith.constant 0 : index
    %c0_9 = arith.constant 0 : index
    %c0_10 = arith.constant 0 : index
    %25 = vector.load %arg1[%c0_8, %c0_9, %c0_10] : memref<1x8x256xf32, #tpu.memory_space<vmem>>, vector<1x1x256xf32>
    %26 = vector.shape_cast %25 : vector<1x1x256xf32> to vector<1x256xf32>
    %27 = vector.shape_cast %24 : vector<36x1xi1> to vector<36x1xi1>
    %28 = vector.broadcast %27 : vector<36x1xi1> to vector<36x256xi1>
    %29 = vector.shape_cast %26 : vector<1x256xf32> to vector<1x256xf32>
    %30 = vector.broadcast %29 : vector<1x256xf32> to vector<36x256xf32>
    %31 = arith.select %28, %30, %5 : vector<36x256xi1>, vector<36x256xf32>
    %c0_11 = arith.constant 0 : index
    %c6 = arith.constant 6 : index
    %c0_12 = arith.constant 0 : index
    %32 = vector.load %arg2[%c0_11, %c6, %c0_12] : memref<1x78x256xf32, #tpu.memory_space<vmem>>, vector<1x36x256xf32>
    %33 = vector.shape_cast %32 : vector<1x36x256xf32> to vector<36x256xf32>
    %34 = vector.shape_cast %31 : vector<36x256xf32> to vector<1x36x256xf32>
    tpu.vector_store %arg2[%c0_11, %c6, %c0_12], %34 {strides = array<i32>} : memref<1x78x256xf32, #tpu.memory_space<vmem>>, vector<1x36x256xf32>,
    %c0_13 = arith.constant 0 : index
    %c1 = arith.constant 1 : index
    %c0_14 = arith.constant 0 : index
    %35 = vector.load %arg1[%c0_13, %c1, %c0_14] : memref<1x8x256xf32, #tpu.memory_space<vmem>>, vector<1x1x256xf32>
    %36 = vector.shape_cast %35 : vector<1x1x256xf32> to vector<1x256xf32>
    %37 = vector.shape_cast %24 : vector<36x1xi1> to vector<36x1xi1>
    %38 = vector.broadcast %37 : vector<36x1xi1> to vector<36x256xi1>
    %39 = vector.shape_cast %36 : vector<1x256xf32> to vector<1x256xf32>
    %40 = vector.broadcast %39 : vector<1x256xf32> to vector<36x256xf32>
    %41 = arith.select %38, %40, %5 : vector<36x256xi1>, vector<36x256xf32>
    %c0_15 = arith.constant 0 : index
    %c42 = arith.constant 42 : index
    %c0_16 = arith.constant 0 : index
    %42 = vector.load %arg2[%c0_15, %c42, %c0_16] : memref<1x78x256xf32, #tpu.memory_space<vmem>>, vector<1x36x256xf32>
    %43 = vector.shape_cast %42 : vector<1x36x256xf32> to vector<36x256xf32>
    %44 = vector.shape_cast %41 : vector<36x256xf32> to vector<1x36x256xf32>
    tpu.vector_store %arg2[%c0_15, %c42, %c0_16], %44 {strides = array<i32>} : memref<1x78x256xf32, #tpu.memory_space<vmem>>, vector<1x36x256xf32>,
    return
  }
  func.func @transform_0(%arg0: i32) -> (i32, i32, i32) {
    %c0_i32 = arith.constant 0 : i32
    %c0_i32_0 = arith.constant 0 : i32
    %c0_i32_1 = arith.constant 0 : i32
    return %arg0, %c0_i32, %c0_i32_0 : i32, i32, i32
  }
  func.func @transform_1(%arg0: i32) -> (i32, i32, i32) {
    %c0_i32 = arith.constant 0 : i32
    %c0_i32_0 = arith.constant 0 : i32
    %c0_i32_1 = arith.constant 0 : i32
    return %arg0, %c0_i32, %c0_i32_0 : i32, i32, i32
  }
}

</mosaic_0001>

<llo_original>
// kernel: get_choise.1
$region0: #{get_choise.1}
  #allocation0 [shape = 'u32[]', space=smem, size = 0x4, offset = 0x4, fixed_abs, tag = 'smem constant byte address 0x4 - core index']
  #allocation1 [shape = 'u32[144,128]{1,0:T(1,128)}', space=vmem, size = 0x12000, scoped, tag = 'internal scratch']
  %s0 = inlined_call_operand.vmem [shape: f32[2,8,256], index: 0, kind: input, shape index: {}]
  %s1 = inlined_call_operand.vmem [shape: f32[2,78,256], index: 1, kind: output, shape index: {}]
  %s2 = sld [smem:[#allocation0]]
  $region37: #{get_choise.1} parent=0
    _
  %s4 = ssub.s32 1, %s2
  %s5 = scalar_select 0, %s4, %s2
  loop: start=0, step=1, limit=4
  $region2: #{get_choise.1} parent=0 // loop_pre_header
    _
  $region3: #{get_choise.1} parent=0 // loop_header
    %s7 = sphi 0, %s11
    %p8 = scmp.ge.s32.totalorder %s7, 4
    %s17 = sphi 0, %s19
    %s20 = sphi 0, %s17
    %s21 = sphi 0, %s20
    %s37 = sphi 0, %s21
    %s43 = sphi 0, %s45
    %s46 = sphi 0, %s43
    %s47 = sphi 0, %s46
    %s63 = sphi 0, %s47
  $region4: #{get_choise.1} parent=0 // loop_header_branch
    %10 = sbr.rel (%p8) target = $region8
  $region5: #{get_choise.1} parent=0 // loop_body
    %s12 = ssub.s32 %s7, 1
    %s13 = ssub.s32 %s7, 2
    %s14 = sadd.s32 %s7, 1
    %s15 = ssub.s32 %s7, %s14
    %p16 = scmp.eq.s32.totalorder %s15, 0
    %s18 = sadd.s32 %s17, 1
    %s19 = scalar_select %p16, %s17, %s18
    %p22 = pneg %p16
    %p23 = scmp.eq.s32.totalorder %s7, 1
    %p24 = por %p22, %p23
    %p25 = scmp.ne.s32.totalorder %s17, %s20
    %p26 = scmp.eq.s32.totalorder %s7, 0
    %p27 = por %p25, %p26
    %p28 = scmp.ne.s32.totalorder %s17, %s20
    %p29 = scmp.eq.s32.totalorder %s12, 1
    %p30 = por %p28, %p29
    %p31 = scmp.ne.s32.totalorder %s20, %s21
    %p32 = scmp.eq.s32.totalorder %s12, 0
    %p33 = por %p31, %p32
    %p34 = scmp.ne.s32.totalorder %s20, %s21
    %p35 = scmp.eq.s32.totalorder %s13, 1
    %p36 = por %p34, %p35
    %p38 = scmp.ne.s32.totalorder %s21, %s37
    %p39 = scmp.eq.s32.totalorder %s13, 0
    %p40 = por %p38, %p39
    %s41 = ssub.s32 %s7, %s14
    %p42 = scmp.eq.s32.totalorder %s41, 0
    %s44 = sadd.s32 %s43, 1
    %s45 = scalar_select %p42, %s43, %s44
    %p48 = pneg %p42
    %p49 = scmp.eq.s32.totalorder %s7, 1
    %p50 = por %p48, %p49
    %p51 = scmp.ne.s32.totalorder %s43, %s46
    %p52 = scmp.eq.s32.totalorder %s7, 0
    %p53 = por %p51, %p52
    %p54 = scmp.ne.s32.totalorder %s43, %s46
    %p55 = scmp.eq.s32.totalorder %s12, 1
    %p56 = por %p54, %p55
    %p57 = scmp.ne.s32.totalorder %s46, %s47
    %p58 = scmp.eq.s32.totalorder %s12, 0
    %p59 = por %p57, %p58
    %p60 = scmp.ne.s32.totalorder %s46, %s47
    %p61 = scmp.eq.s32.totalorder %s13, 1
    %p62 = por %p60, %p61
    %p64 = scmp.ne.s32.totalorder %s47, %s63
    %p65 = scmp.eq.s32.totalorder %s13, 0
    %p66 = por %p64, %p65
    %p67 = scmp.le.s32.totalorder 1, %s7
    %p68 = scmp.lt.s32.totalorder %s7, 3
    %p69 = pnand %p67, %p68
    %p70 = pneg %p69
    // Predicated region
    $region9: #{get_choise.1} parent=5 // pred_check
      _
    $region10: #{get_choise.1} parent=5 // pred_check_branch
      %72 = sbr.rel (%p69) target = $region12
    $region11: #{get_choise.1} parent=5 // pred_region
      %s73 = ssub.s32 %s7, 1
    $region12: #{get_choise.1} parent=5 // pred_fallthru
      _
    %p74 = scmp.lt.s32.totalorder %s7, 2
    // Predicated region
    $region13: #{get_choise.1} parent=5 // pred_check
      %p75 = pneg %p74
    $region14: #{get_choise.1} parent=5 // pred_check_branch
      %77 = sbr.rel (%p75) target = $region16
    $region15: #{get_choise.1} parent=5 // pred_region
      // Predicated region
      $region17: #{get_choise.1} parent=15 // pred_check
        %p78 = pneg %p27
      $region18: #{get_choise.1} parent=15 // pred_check_branch
        %80 = sbr.rel (%p78) target = $region20
      $region19: #{get_choise.1} parent=15 // pred_region
        %p81 = scmp.lt.s32.totalorder %s7, 1
        %s82 = scalar_select %p81, %s7, 1
        %s83 = smul.addr %s82, 2
        %s84 = smul.addr %s83, 8
        %s85 = scalar_lea.vmem %s0, %s84
      $region20: #{get_choise.1} parent=15 // pred_fallthru
        _
    $region16: #{get_choise.1} parent=5 // pred_fallthru
      _
    %p86 = scmp.le.s32.totalorder 1, %s7
    %p87 = scmp.lt.s32.totalorder %s7, 3
    %p88 = pnand %p86, %p87
    %p89 = pneg %p88
    // Predicated region
    $region21: #{get_choise.1} parent=5 // pred_check
      _
    $region22: #{get_choise.1} parent=5 // pred_check_branch
      %91 = sbr.rel (%p88) target = $region24
    $region23: #{get_choise.1} parent=5 // pred_region
      %s92 = ssub.s32 %s7, 1
      %p93 = scmp.lt.s32.totalorder %s12, 1
      %s94 = scalar_select %p93, %s12, 1
      %s95 = smul.addr %s94, 2
      %s96 = smul.addr %s95, 8
      %s97 = scalar_lea.vmem %s0, %s96
      %p98 = pneg %p33
      %p99 = pneg %p30
      %p100 = pneg %p59
      %p101 = pneg %p56
      %p102 = scmp.lt.s32.totalorder %s12, 1
      %s103 = scalar_select %p102, %s12, 1
      %s104 = smul.addr %s103, 20
      %s105 = smul.addr %s104, 8
      %s106 = scalar_lea.vmem %s1, %s105
      %p107 = scmp.lt.s32.totalorder %s12, 1
      %s108 = scalar_select %p107, %s12, 1
      %s109 = smul.addr %s108, 2
      %s110 = smul.addr %s109, 8
      %s111 = scalar_lea.vmem %s0, %s110
      %p112 = scmp.lt.s32.totalorder %s12, 1
      %s113 = scalar_select %p112, %s12, 1
      %s114 = smul.addr %s113, 20
      %s115 = smul.addr %s114, 8
      %s116 = scalar_lea.vmem %s1, %s115
      %v117 = vld [vmem:[%s111] sm:$0xfc]
      %v118 = vld [vmem:[%s111 + $0x8] sm:$0xfc]
      %v121 = vrot.slane %v117, 2
      %v122 = vrot.slane %v118, 2
      %125 = vst [vmem:[%s116] sm:$0x3f] %v121
      %126 = vst [vmem:[%s116 + $0x8] sm:$0x3f] %v122
      %v127 = vrot.slane %v117, 4
      %v128 = vrot.slane %v118, 4
      %v131 = vrot.slane %v117, 6
      %v132 = vrot.slane %v118, 6
      %vm135 = vcmask 1045504
      %v136 = vsel %vm135, %v121, %v127
      %v137 = vsel %vm135, %v122, %v128
      %vm138 = vcmask 1043456
      %v139 = vsel %vm138, %v127, %v131
      %v140 = vsel %vm138, %v128, %v132
      %vm141 = vcmask 1041408
      %v142 = vsel %vm141, %v131, %v117
      %v143 = vsel %vm141, %v132, %v118
      %v144 = vlaneseq
      %v145 = vshrl.u32 %v144, 7
      %v146 = vadd.s32 %v145, 8
      %v147 = vadd.s32 %v145, 16
      %v148 = vadd.s32 %v145, 24
      %v149 = vadd.s32 %v145, 32
      %vm150 = vcmp.lt.s32.totalorder %v145, 0
      %v151 = vsub.s32 0, %v145
      %v152 = vsel %vm150, %v151, %v145
      %v153 = vmul.u32.u64.compose %v152, 2454267026
      %v154 = vextract.low.u32 %v153
      %v155 = vextract.high.u32 %v153
      %vm156 = vc.u32 %v154, 2454267026
      %v157 = vsel %vm156, 1, 0
      %v158 = vadd.s32 %v155, %v157
      %v159 = vshrl.u32 %v158, 2
      %v160 = vmul.u32 %v159, 7
      %v161 = vsub.s32 %v152, %v160
      %v162 = vsub.s32 0, %v161
      %v163 = vsel %vm150, %v162, %v161
      %vm164 = vcmp.lt.s32.totalorder %v146, 0
      %v165 = vsub.s32 0, %v146
      %v166 = vsel %vm164, %v165, %v146
      %v167 = vmul.u32.u64.compose %v166, 2454267026
      %v168 = vextract.low.u32 %v167
      %v169 = vextract.high.u32 %v167
      %vm170 = vc.u32 %v168, 2454267026
      %v171 = vsel %vm170, 1, 0
      %v172 = vadd.s32 %v169, %v171
      %v173 = vshrl.u32 %v172, 2
      %v174 = vmul.u32 %v173, 7
      %v175 = vsub.s32 %v166, %v174
      %v176 = vsub.s32 0, %v175
      %v177 = vsel %vm164, %v176, %v175
      %vm178 = vcmp.lt.s32.totalorder %v147, 0
      %v179 = vsub.s32 0, %v147
      %v180 = vsel %vm178, %v179, %v147
      %v181 = vmul.u32.u64.compose %v180, 2454267026
      %v182 = vextract.low.u32 %v181
      %v183 = vextract.high.u32 %v181
      %vm184 = vc.u32 %v182, 2454267026
      %v185 = vsel %vm184, 1, 0
      %v186 = vadd.s32 %v183, %v185
      %v187 = vshrl.u32 %v186, 2
      %v188 = vmul.u32 %v187, 7
      %v189 = vsub.s32 %v180, %v188
      %v190 = vsub.s32 0, %v189
      %v191 = vsel %vm178, %v190, %v189
      %vm192 = vcmp.lt.s32.totalorder %v148, 0
      %v193 = vsub.s32 0, %v148
      %v194 = vsel %vm192, %v193, %v148
      %v195 = vmul.u32.u64.compose %v194, 2454267026
      %v196 = vextract.low.u32 %v195
      %v197 = vextract.high.u32 %v195
      %vm198 = vc.u32 %v196, 2454267026
      %v199 = vsel %vm198, 1, 0
      %v200 = vadd.s32 %v197, %v199
      %v201 = vshrl.u32 %v200, 2
      %v202 = vmul.u32 %v201, 7
      %v203 = vsub.s32 %v194, %v202
      %v204 = vsub.s32 0, %v203
      %v205 = vsel %vm192, %v204, %v203
      %vm206 = vcmp.lt.s32.totalorder %v149, 0
      %v207 = vsub.s32 0, %v149
      %v208 = vsel %vm206, %v207, %v149
      %v209 = vmul.u32.u64.compose %v208, 2454267026
      %v210 = vextract.low.u32 %v209
      %v211 = vextract.high.u32 %v209
      %vm212 = vc.u32 %v210, 2454267026
      %v213 = vsel %vm212, 1, 0
      %v214 = vadd.s32 %v211, %v213
      %v215 = vshrl.u32 %v214, 2
      %v216 = vmul.u32 %v215, 7
      %v217 = vsub.s32 %v208, %v216
      %v218 = vsub.s32 0, %v217
      %v219 = vsel %vm206, %v218, %v217
      %vm220 = vcmp.ne.s32.totalorder %v163, 0
      %vm221 = vcmp.ne.s32.totalorder %v177, 0
      %vm222 = vcmp.ne.s32.totalorder %v191, 0
      %vm223 = vcmp.ne.s32.totalorder %v205, 0
      %vm224 = vcmp.ne.s32.totalorder %v219, 0
      %vm225 = vcmp.lt.s32.totalorder %v163, 0
      %vm226 = vcmp.lt.s32.totalorder %v177, 0
      %vm227 = vcmp.lt.s32.totalorder %v191, 0
      %vm228 = vcmp.lt.s32.totalorder %v205, 0
      %vm229 = vcmp.lt.s32.totalorder %v219, 0
      %vm230 = vmand %vm225, %vm220
      %vm231 = vmand %vm226, %vm221
      %vm232 = vmand %vm227, %vm222
      %vm233 = vmand %vm228, %vm223
      %vm234 = vmand %vm229, %vm224
      %v235 = vadd.s32 %v163, 7
      %v236 = vadd.s32 %v177, 7
      %v237 = vadd.s32 %v191, 7
      %v238 = vadd.s32 %v205, 7
      %v239 = vadd.s32 %v219, 7
      %v240 = vsel %vm230, %v235, %v163
      %v241 = vsel %vm231, %v236, %v177
      %v242 = vsel %vm232, %v237, %v191
      %v243 = vsel %vm233, %v238, %v205
      %v244 = vsel %vm234, %v239, %v219
      %vm245 = vcmp.eq.s32.totalorder %v240, 0
      %vm246 = vcmp.eq.s32.totalorder %v241, 0
      %vm247 = vcmp.eq.s32.totalorder %v242, 0
      %vm248 = vcmp.eq.s32.totalorder %v243, 0
      %vm249 = vcmp.eq.s32.totalorder %v244, 0
      %v250 = vld [vmem:[%s111] ss:$8 sm:$0x3]
      %v251 = vsel %vm245, 1, 0
      %v252 = vsel %vm246, 1, 0
      %v253 = vsel %vm247, 1, 0
      %v254 = vsel %vm248, 1, 0
      %v255 = vsel %vm249, 1, 0
      %vm256 = vcmp.eq.s32.totalorder %v251, 1
      %vm257 = vcmp.eq.s32.totalorder %v252, 1
      %vm258 = vcmp.eq.s32.totalorder %v253, 1
      %vm259 = vcmp.eq.s32.totalorder %v254, 1
      %vm260 = vcmp.eq.s32.totalorder %v255, 1
      %v262 = vlaneseq
      %v263 = vshrl.u32 %v262, 7
      %v264 = vsub.s32 0, %v263
      %v265 = vrot.slane %v250, %v264
      %v266 = vlaneseq
      %v267 = vshrl.u32 %v266, 7
      %v268 = vsub.s32 1, %v267
      %v269 = vrot.slane %v250, %v268
      %v272 = vsel %vm256, %v265, %v136
      %v273 = vsel %vm256, %v269, %v137
      %v274 = vsel %vm257, %v265, %v139
      %v275 = vsel %vm257, %v269, %v140
      %v276 = vsel %vm258, %v265, %v142
      %v277 = vsel %vm258, %v269, %v143
      %v278 = vsel %vm259, %v265, %v136
      %v279 = vsel %vm259, %v269, %v137
      %v280 = vsel %vm260, %v265, %v127
      %v281 = vsel %vm260, %v269, %v128
      %v292 = vrot.slane %v272, 2
      %v293 = vrot.slane %v273, 2
      %v294 = vrot.slane %v274, 2
      %v295 = vsel %vm135, %v292, %v294
      %v296 = vrot.slane %v275, 2
      %v297 = vsel %vm135, %v293, %v296
      %v298 = vrot.slane %v276, 2
      %v299 = vsel %vm135, %v294, %v298
      %v300 = vrot.slane %v277, 2
      %v301 = vsel %vm135, %v296, %v300
      %v302 = vrot.slane %v278, 2
      %v303 = vsel %vm135, %v298, %v302
      %v304 = vrot.slane %v279, 2
      %v305 = vsel %vm135, %v300, %v304
      %v306 = vrot.slane %v280, 2
      %v307 = vsel %vm135, %v302, %v306
      %v308 = vrot.slane %v281, 2
      %v309 = vsel %vm135, %v304, %v308
      %322 = vst [vmem:[%s116] sm:$0xc0] %v292
      %323 = vst [vmem:[%s116 + $0x8] sm:$0xc0] %v293
      %324 = vst [vmem:[%s116 + $0x10] sm:$0xff] %v295
      %325 = vst [vmem:[%s116 + $0x18] sm:$0xff] %v297
      %326 = vst [vmem:[%s116 + $0x20] sm:$0xff] %v299
      %327 = vst [vmem:[%s116 + $0x28] sm:$0xff] %v301
      %328 = vst [vmem:[%s116 + $0x30] sm:$0xff] %v303
      %329 = vst [vmem:[%s116 + $0x38] sm:$0xff] %v305
      %330 = vst [vmem:[%s116 + $0x40] sm:$0xff] %v307
      %331 = vst [vmem:[%s116 + $0x48] sm:$0xff] %v309
      %332 = vst [vmem:[%s116 + $0x50] sm:$0x3] %v306
      %333 = vst [vmem:[%s116 + $0x58] sm:$0x3] %v308
      %s334 = scalar_lea.vmem %s111, 1
      %v335 = vld [vmem:[%s334] ss:$8 sm:$0x3]
      %v337 = vlaneseq
      %v338 = vshrl.u32 %v337, 7
      %v339 = vsub.s32 0, %v338
      %v340 = vrot.slane %v335, %v339
      %v341 = vlaneseq
      %v342 = vshrl.u32 %v341, 7
      %v343 = vsub.s32 1, %v342
      %v344 = vrot.slane %v335, %v343
      %v347 = vsel %vm256, %v340, %v136
      %v348 = vsel %vm256, %v344, %v137
      %v349 = vsel %vm257, %v340, %v139
      %v350 = vsel %vm257, %v344, %v140
      %v351 = vsel %vm258, %v340, %v142
      %v352 = vsel %vm258, %v344, %v143
      %v353 = vsel %vm259, %v340, %v136
      %v354 = vsel %vm259, %v344, %v137
      %v355 = vsel %vm260, %v340, %v127
      %v356 = vsel %vm260, %v344, %v128
      %v367 = vrot.slane %v347, 6
      %v368 = vrot.slane %v348, 6
      %v369 = vrot.slane %v349, 6
      %v370 = vsel %vm141, %v367, %v369
      %v371 = vrot.slane %v350, 6
      %v372 = vsel %vm141, %v368, %v371
      %v373 = vrot.slane %v351, 6
      %v374 = vsel %vm141, %v369, %v373
      %v375 = vrot.slane %v352, 6
      %v376 = vsel %vm141, %v371, %v375
      %v377 = vrot.slane %v353, 6
      %v378 = vsel %vm141, %v373, %v377
      %v379 = vrot.slane %v354, 6
      %v380 = vsel %vm141, %v375, %v379
      %v381 = vrot.slane %v355, 6
      %v382 = vsel %vm141, %v377, %v381
      %v383 = vrot.slane %v356, 6
      %v384 = vsel %vm141, %v379, %v383
      %395 = vst [vmem:[%s116 + $0x50] sm:$0xfc] %v367
      %396 = vst [vmem:[%s116 + $0x58] sm:$0xfc] %v368
      %397 = vst [vmem:[%s116 + $0x60] sm:$0xff] %v370
      %398 = vst [vmem:[%s116 + $0x68] sm:$0xff] %v372
      %399 = vst [vmem:[%s116 + $0x70] sm:$0xff] %v374
      %400 = vst [vmem:[%s116 + $0x78] sm:$0xff] %v376
      %401 = vst [vmem:[%s116 + $0x80] sm:$0xff] %v378
      %402 = vst [vmem:[%s116 + $0x88] sm:$0xff] %v380
      %403 = vst [vmem:[%s116 + $0x90] sm:$0x3f] %v382
      %404 = vst [vmem:[%s116 + $0x98] sm:$0x3f] %v384
      %p405 = scmp.lt.s32.totalorder %s12, 1
      %s406 = scalar_select %p405, %s12, 1
      %s407 = smul.addr %s406, 20
      %s408 = smul.addr %s407, 8
      %s409 = scalar_lea.vmem %s1, %s408
      // Predicated region
      $region25: #{get_choise.1} parent=23 // pred_check
        %p410 = pneg %p56
      $region26: #{get_choise.1} parent=23 // pred_check_branch
        %412 = sbr.rel (%p410) target = $region28
      $region27: #{get_choise.1} parent=23 // pred_region
        _
      $region28: #{get_choise.1} parent=23 // pred_fallthru
        _
    $region24: #{get_choise.1} parent=5 // pred_fallthru
      _
    %p413 = scmp.le.s32.totalorder 2, %s7
    // Predicated region
    $region29: #{get_choise.1} parent=5 // pred_check
      %p414 = pneg %p413
    $region30: #{get_choise.1} parent=5 // pred_check_branch
      %416 = sbr.rel (%p414) target = $region32
    $region31: #{get_choise.1} parent=5 // pred_region
      %s417 = ssub.s32 %s7, 2
      // Predicated region
      $region33: #{get_choise.1} parent=31 // pred_check
        %p418 = pneg %p62
      $region34: #{get_choise.1} parent=31 // pred_check_branch
        %420 = sbr.rel (%p418) target = $region36
      $region35: #{get_choise.1} parent=31 // pred_region
        %p421 = scmp.lt.s32.totalorder %s13, 1
        %s422 = scalar_select %p421, %s13, 1
        %s423 = smul.addr %s422, 20
        %s424 = smul.addr %s423, 8
        %s425 = scalar_lea.vmem %s1, %s424
      $region36: #{get_choise.1} parent=31 // pred_fallthru
        _
    $region32: #{get_choise.1} parent=5 // pred_fallthru
      _
  $region6: #{get_choise.1} parent=0 // loop_footer
    %s11 = sadd.s32 1, %s7
  $region7: #{get_choise.1} parent=0 // loop_footer_branch
    %6 = sbr.rel target = $region3
  $region8: #{get_choise.1} parent=0 // loop_exit
    _

</llo_original>
